<compile_context>
chip_gen: v5e
topology: v5e:2x2
jax: 0.10.0
libtpu: 0.0.40
codegen_flags: <defaults>
</compile_context>

<pallas_src>
import functools

import jax
import jax.numpy as jnp
from jax.experimental import pallas as pl
from jax.experimental.pallas import tpu as pltpu


# ----------------------------- Pallas kernel --------------------------------

def _fused_model_kernel(x_ref, c_ref, o_ref, *, Bt):
    """Whole model for a block of Bt batch elements.

    x_ref: (Bt, 1, N)   flattened input pixels (lane axis = N)
    c_ref: (4, C, C)    packed trace-time constants:
                          [0]=M2, [1]=M1, [2]=M0 (+ head mask)
                          [3]: row0=wv', row1=bv', row2=u=l3_w@wo, row3[0]=b_out
    o_ref: (Bt, 1, N)
    """
    M2 = c_ref[0]                 # (C, C)
    M1 = c_ref[1]
    M0 = c_ref[2]
    V = c_ref[3]
    wv_row = V[0:1, :]            # (1, C)
    bv_row = V[1:2, :]            # (1, C)
    u_row = V[2:3, :]             # (1, C)
    b0 = V[3:4, 0:1]              # (1, 1)

    for bi in range(Bt):          # static unroll; Bt is tiny
        x = x_ref[bi]                                         # (1, N)
        a1 = jnp.sum(x, axis=-1, keepdims=True)               # (1, 1)  Sum x
        a2 = jnp.sum(x * x, axis=-1, keepdims=True)           # (1, 1)  Sum x^2

        # Channel-channel logits; scale + block-diagonal head mask baked in.
        s = a2 * M2 + a1 * M1 + M0                            # (C, C)
        s = s - jnp.max(s, axis=-1, keepdims=True)
        p = jnp.exp(s)
        p = p / jnp.sum(p, axis=-1, keepdims=True)            # exact divide

        # Everything after the softmax is affine in x: y = alpha*x + beta.
        r = jnp.dot(u_row, p, preferred_element_type=jnp.float32)   # (1, C)
        alpha = jnp.sum(r * wv_row, axis=-1, keepdims=True)         # (1, 1)
        beta = jnp.sum(r * bv_row, axis=-1, keepdims=True) + b0     # (1, 1)
        o_ref[bi] = (alpha * x + beta).astype(o_ref.dtype)


# ------------------------------- wrapper -------------------------------------

def _pick_batch_block(B):
    # Keep >=2 parallel grid steps when possible (v7x has 2 TensorCores) while
    # amortizing the per-grid-step fixed cost for larger B (v5e/v6e single TC).
    if B >= 2 and B % 2 == 0:
        return B // 2
    return 1


def model_forward(params, x, n, m, *, num_heads=4):
    """x: (B, 1, H, W) -> (B, 1, H, W). n, m unused: decompose/recompose cancel
    around the channel attention (see header note)."""
    del n, m
    B, Cin, H, W = x.shape
    assert Cin == 1
    C = params["wq"].shape[0]
    hd = C // num_heads
    scale = float(hd) ** -0.5
    N = H * W

    # ---- trace-time weight folding (tiny (C,C) ops, done once per call) ----
    l1_w = params["l1_w"][:, 0]                      # (C,)
    l1_b = params["l1_b"]                            # (C,)

    def fold(w):                                     # fold Conv2d(1,C,1) through
        return w @ l1_w, w @ l1_b                    # (C,), (C,)

    wq_p, bq_p = fold(params["wq"])
    wk_p, bk_p = fold(params["wk"])
    wv_p, bv_p = fold(params["wv"])

    M2 = scale * jnp.outer(wq_p, wk_p)
    M1 = scale * (jnp.outer(wq_p, bk_p) + jnp.outer(bq_p, wk_p))
    M0 = (scale * N) * jnp.outer(bq_p, bk_p)

    head = jnp.arange(C) // hd                       # block-diagonal head mask
    same_head = head[:, None] == head[None, :]
    M2 = jnp.where(same_head, M2, 0.0)
    M1 = jnp.where(same_head, M1, 0.0)
    M0 = jnp.where(same_head, M0, -1e30)

    u = (params["l3_w"] @ params["wo"])[0]                                  # (C,)
    b_out = (params["l3_w"] @ params["bo"] + params["l3_b"][:, None])[0, 0]  # ()

    slab = jnp.zeros((C, C), jnp.float32)
    slab = slab.at[0].set(wv_p).at[1].set(bv_p).at[2].set(u)
    slab = slab.at[3, 0].set(b_out)
    consts = jnp.stack([M2, M1, M0, slab], axis=0).astype(jnp.float32)  # (4,C,C)

    x2 = x.reshape(B, 1, N)                          # free reshape, no transpose
    Bt = _pick_batch_block(B)
    grid = (B // Bt,)

    kern = functools.partial(_fused_model_kernel, Bt=Bt)
    out = pl.pallas_call(
        kern,
        out_shape=jax.ShapeDtypeStruct((B, 1, N), x.dtype),
        grid_spec=pltpu.PrefetchScalarGridSpec(
            num_scalar_prefetch=0,
            grid=grid,
            in_specs=[
                pl.BlockSpec((Bt, 1, N), lambda b: (b, 0, 0)),
                pl.BlockSpec((4, C, C), lambda b: (0, 0, 0)),  # fetched once
            ],
            out_specs=pl.BlockSpec((Bt, 1, N), lambda b: (b, 0, 0)),
        ),
        compiler_params=pltpu.CompilerParams(
            dimension_semantics=("parallel",)),
    )(x2, consts)
    return out.reshape(B, 1, H, W)


# --------------------- pure-JAX reference (full structure) -------------------

def decompose2d(x, n, m):
    """(B, C, H, W) -> (B*n*m, C, H//n, W//m), subdomain-major (i*m + j)."""
    B, C, H, W = x.shape
    h, w = H // n, W // m
    x = x.reshape(B, C, n, h, m, w)
    x = jnp.transpose(x, (0, 2, 4, 1, 3, 5))         # (B, n, m, C, h, w)
    return x.reshape(B * n * m, C, h, w)


def recompose2d(x, n, m):
    """Inverse of decompose2d."""
    S = n * m
    BS, C, h, w = x.shape
    B = BS // S
    x = x.reshape(B, n, m, C, h, w)
    x = jnp.transpose(x, (0, 3, 1, 4, 2, 5))         # (B, C, n, h, m, w)
    return x.reshape(B, C, n * h, m * w)


def reference_forward(params, x, n, m, *, num_heads=4):
    def conv(x, w, b):
        return jnp.einsum("bchw,oc->bohw", x, w) + b[None, :, None, None]

    x = conv(x, params["l1_w"], params["l1_b"])
    x = decompose2d(x, n, m)
    S = n * m
    BS, C, h, w = x.shape
    B = BS // S
    xr = jnp.transpose(x.reshape(B, S, C, h, w), (0, 2, 1, 3, 4)).reshape(B, C, -1)
    q = jnp.einsum("oc,bcn->bon", params["wq"], xr)
    k = jnp.einsum("oc,bcn->bon", params["wk"], xr)
    v = jnp.einsum("oc,bcn->bon", params["wv"], xr)
    hd = C // num_heads
    q = q.reshape(B, num_heads, hd, -1)
    k = k.reshape(B, num_heads, hd, -1)
    v = v.reshape(B, num_heads, hd, -1)
    s = jnp.einsum("bhcn,bhdn->bhcd", q, k) * (hd ** -0.5)
    p = jax.nn.softmax(s, axis=-1)
    o = jnp.einsum("bhcd,bhdn->bhcn", p, v).reshape(B, C, -1)
    y = jnp.einsum("oc,bcn->bon", params["wo"], o) + params["bo"][None]
    y = jnp.transpose(y.reshape(B, C, S, h, w), (0, 2, 1, 3, 4)).reshape(BS, C, h, w)
    y = recompose2d(y, n, m)
    return conv(y, params["l3_w"], params["l3_b"])


# ----------------------------------- main ------------------------------------

def init_params(key, C=32):
    ks = jax.random.split(key, 8)
    s = 0.1
    return {
        "l1_w": jax.random.normal(ks[0], (C, 1), jnp.float32) * s,   # Conv2d(1,32,1)
        "l1_b": jax.random.normal(ks[1], (C,), jnp.float32) * s,
        "wq": jax.random.normal(ks[2], (C, C), jnp.float32) * s,     # qkv_bias=False
        "wk": jax.random.normal(ks[3], (C, C), jnp.float32) * s,
        "wv": jax.random.normal(ks[4], (C, C), jnp.float32) * s,
        "wo": jax.random.normal(ks[5], (C, C), jnp.float32) * s,
        "bo": jax.random.normal(ks[6], (C, 1), jnp.float32) * s,
        "l3_w": jax.random.normal(ks[7], (1, C), jnp.float32) * s,   # Conv2d(32,1,1)
        "l3_b": jnp.zeros((1,), jnp.float32),
    }


if __name__ == "__main__":
    key = jax.random.PRNGKey(0)
    pkey, xkey = jax.random.split(key)
    params = init_params(pkey)

    B, H, W = 2, 16, 16
    n, m = 2, 2
    x = jax.random.normal(xkey, (B, 1, H, W), jnp.float32)

    fwd = jax.jit(functools.partial(model_forward, n=n, m=m))
    out = jax.block_until_ready(fwd(params, x))
    assert out.shape == (B, 1, H, W), out.shape

    ref = jax.block_until_ready(reference_forward(params, x, n, m))
    max_err = float(jnp.max(jnp.abs(out - ref)))
    # re-associated (rank-1) weight folding -> slightly looser tolerance
    assert jnp.allclose(out, ref, atol=1e-3, rtol=1e-3), max_err

    print("KERNEL_OK")
</pallas_src>

<mosaic_0001>
module attributes {stable_mosaic.version = 11 : i64} {
  func.func @_fused_model_kernel(%arg0: i32, %arg1: memref<1x1x256xf32, #tpu.memory_space<vmem>>, %arg2: memref<4x32x32xf32, #tpu.memory_space<vmem>>, %arg3: memref<1x1x256xf32, #tpu.memory_space<vmem>>) attributes {dimension_semantics = [#tpu.dimension_semantics<parallel>], iteration_bounds = array<i64: 2>, scalar_prefetch = 0 : i64, scratch_operands = 0 : i64, tpu.core_type = #tpu.core_type<tc>, window_params = [{transform_indices = @transform_0, window_bounds = array<i64: 1, 1, 256>}, {pipeline_mode = #tpu.pipeline_mode<synchronous>, transform_indices = @transform_1, window_bounds = array<i64: 4, 32, 32>}, {transform_indices = @transform_2, window_bounds = array<i64: 1, 1, 256>}]} {
    %c0 = arith.constant 0 : index
    %c0_0 = arith.constant 0 : index
    %c0_1 = arith.constant 0 : index
    %0 = vector.load %arg2[%c0, %c0_0, %c0_1] : memref<4x32x32xf32, #tpu.memory_space<vmem>>, vector<1x32x32xf32>
    %1 = vector.shape_cast %0 : vector<1x32x32xf32> to vector<32x32xf32>
    %c1 = arith.constant 1 : index
    %c0_2 = arith.constant 0 : index
    %c0_3 = arith.constant 0 : index
    %2 = vector.load %arg2[%c1, %c0_2, %c0_3] : memref<4x32x32xf32, #tpu.memory_space<vmem>>, vector<1x32x32xf32>
    %3 = vector.shape_cast %2 : vector<1x32x32xf32> to vector<32x32xf32>
    %c2 = arith.constant 2 : index
    %c0_4 = arith.constant 0 : index
    %c0_5 = arith.constant 0 : index
    %4 = vector.load %arg2[%c2, %c0_4, %c0_5] : memref<4x32x32xf32, #tpu.memory_space<vmem>>, vector<1x32x32xf32>
    %5 = vector.shape_cast %4 : vector<1x32x32xf32> to vector<32x32xf32>
    %c3 = arith.constant 3 : index
    %c0_6 = arith.constant 0 : index
    %c0_7 = arith.constant 0 : index
    %6 = vector.load %arg2[%c3, %c0_6, %c0_7] : memref<4x32x32xf32, #tpu.memory_space<vmem>>, vector<1x32x32xf32>
    %7 = vector.shape_cast %6 : vector<1x32x32xf32> to vector<32x32xf32>
    %8 = vector.extract_strided_slice %7 {offsets = [0, 0], sizes = [1, 32], strides = [1, 1]} : vector<32x32xf32> to vector<1x32xf32>
    %9 = vector.extract_strided_slice %7 {offsets = [1, 0], sizes = [1, 32], strides = [1, 1]} : vector<32x32xf32> to vector<1x32xf32>
    %10 = vector.extract_strided_slice %7 {offsets = [2, 0], sizes = [1, 32], strides = [1, 1]} : vector<32x32xf32> to vector<1x32xf32>
    %11 = vector.extract_strided_slice %7 {offsets = [3, 0], sizes = [1, 1], strides = [1, 1]} : vector<32x32xf32> to vector<1x1xf32>
    %c0_8 = arith.constant 0 : index
    %c0_9 = arith.constant 0 : index
    %c0_10 = arith.constant 0 : index
    %12 = vector.load %arg1[%c0_8, %c0_9, %c0_10] : memref<1x1x256xf32, #tpu.memory_space<vmem>>, vector<1x1x256xf32>
    %13 = vector.shape_cast %12 : vector<1x1x256xf32> to vector<1x256xf32>
    %cst = arith.constant dense<0.000000e+00> : vector<1xf32>
    %14 = vector.multi_reduction <add>, %13, %cst [1] : vector<1x256xf32> to vector<1xf32>
    %15 = vector.shape_cast %14 : vector<1xf32> to vector<1x1xf32>
    %16 = arith.mulf %13, %13 : vector<1x256xf32>
    %cst_11 = arith.constant dense<0.000000e+00> : vector<1xf32>
    %17 = vector.multi_reduction <add>, %16, %cst_11 [1] : vector<1x256xf32> to vector<1xf32>
    %18 = vector.shape_cast %17 : vector<1xf32> to vector<1x1xf32>
    %19 = vector.broadcast %18 : vector<1x1xf32> to vector<32x32xf32>
    %20 = arith.mulf %19, %1 : vector<32x32xf32>
    %21 = vector.broadcast %15 : vector<1x1xf32> to vector<32x32xf32>
    %22 = arith.mulf %21, %3 : vector<32x32xf32>
    %23 = arith.addf %20, %22 : vector<32x32xf32>
    %24 = arith.addf %23, %5 : vector<32x32xf32>
    %cst_12 = arith.constant dense<0xFF800000> : vector<32xf32>
    %25 = vector.multi_reduction <maximumf>, %24, %cst_12 [1] : vector<32x32xf32> to vector<32xf32>
    %26 = vector.shape_cast %25 : vector<32xf32> to vector<32x1xf32>
    %27 = vector.broadcast %26 : vector<32x1xf32> to vector<32x32xf32>
    %28 = arith.subf %24, %27 : vector<32x32xf32>
    %29 = math.exp %28 : vector<32x32xf32>
    %cst_13 = arith.constant dense<0.000000e+00> : vector<32xf32>
    %30 = vector.multi_reduction <add>, %29, %cst_13 [1] : vector<32x32xf32> to vector<32xf32>
    %31 = vector.shape_cast %30 : vector<32xf32> to vector<32x1xf32>
    %32 = vector.broadcast %31 : vector<32x1xf32> to vector<32x32xf32>
    %33 = arith.divf %29, %32 : vector<32x32xf32>
    %cst_14 = arith.constant dense<0.000000e+00> : vector<1x32xf32>
    %34 = tpu.matmul %10, %33, %cst_14 {dimension_numbers = #tpu.dot_dimension_numbers<[1], [0], [0], [1], [0, 0, 1, 1], [], []>} : vector<1x32xf32>, vector<32x32xf32>, vector<1x32xf32> -> vector<1x32xf32>
    %35 = arith.mulf %34, %8 : vector<1x32xf32>
    %cst_15 = arith.constant dense<0.000000e+00> : vector<1xf32>
    %36 = vector.multi_reduction <add>, %35, %cst_15 [1] : vector<1x32xf32> to vector<1xf32>
    %37 = vector.shape_cast %36 : vector<1xf32> to vector<1x1xf32>
    %38 = arith.mulf %34, %9 : vector<1x32xf32>
    %cst_16 = arith.constant dense<0.000000e+00> : vector<1xf32>
    %39 = vector.multi_reduction <add>, %38, %cst_16 [1] : vector<1x32xf32> to vector<1xf32>
    %40 = vector.shape_cast %39 : vector<1xf32> to vector<1x1xf32>
    %41 = arith.addf %40, %11 : vector<1x1xf32>
    %42 = vector.broadcast %37 : vector<1x1xf32> to vector<1x256xf32>
    %43 = arith.mulf %42, %13 : vector<1x256xf32>
    %44 = vector.broadcast %41 : vector<1x1xf32> to vector<1x256xf32>
    %45 = arith.addf %43, %44 : vector<1x256xf32>
    %c0_17 = arith.constant 0 : index
    %c0_18 = arith.constant 0 : index
    %c0_19 = arith.constant 0 : index
    %46 = vector.load %arg3[%c0_17, %c0_18, %c0_19] : memref<1x1x256xf32, #tpu.memory_space<vmem>>, vector<1x1x256xf32>
    %47 = vector.shape_cast %46 : vector<1x1x256xf32> to vector<1x256xf32>
    %48 = vector.shape_cast %45 : vector<1x256xf32> to vector<1x1x256xf32>
    tpu.vector_store %arg3[%c0_17, %c0_18, %c0_19], %48 {strides = array<i32>} : memref<1x1x256xf32, #tpu.memory_space<vmem>>, vector<1x1x256xf32>,
    return
  }
  func.func @transform_0(%arg0: i32) -> (i32, i32, i32) {
    %c0_i32 = arith.constant 0 : i32
    %c0_i32_0 = arith.constant 0 : i32
    %c0_i32_1 = arith.constant 0 : i32
    return %arg0, %c0_i32, %c0_i32_0 : i32, i32, i32
  }
  func.func @transform_1(%arg0: i32) -> (i32, i32, i32) {
    %c0_i32 = arith.constant 0 : i32
    %c0_i32_0 = arith.constant 0 : i32
    %c0_i32_1 = arith.constant 0 : i32
    %c0_i32_2 = arith.constant 0 : i32
    return %c0_i32, %c0_i32_0, %c0_i32_1 : i32, i32, i32
  }
  func.func @transform_2(%arg0: i32) -> (i32, i32, i32) {
    %c0_i32 = arith.constant 0 : i32
    %c0_i32_0 = arith.constant 0 : i32
    %c0_i32_1 = arith.constant 0 : i32
    return %arg0, %c0_i32, %c0_i32_0 : i32, i32, i32
  }
}

</mosaic_0001>

<llo_original>
// kernel: model_forward.1
$region0: #{model_forward.1}
  #allocation0 [shape = 'u32[]', space=smem, size = 0x4, offset = 0x4, fixed_abs, tag = 'smem constant byte address 0x4 - core index']
  #allocation1 [shape = 'u32[72,128]{1,0:T(1,128)}', space=vmem, size = 0x9000, scoped, tag = 'internal scratch']
  %s0 = inlined_call_operand.vmem [shape: f32[2,1,256], index: 0, kind: input, shape index: {}]
  %s1 = inlined_call_operand.vmem [shape: f32[4,32,32], index: 1, kind: input, shape index: {}]
  %s2 = inlined_call_operand.vmem [shape: f32[2,1,256], index: 2, kind: output, shape index: {}]
  %s3 = sld [smem:[#allocation0]]
  $region41: #{model_forward.1} parent=0
    _
  %s5 = ssub.s32 1, %s3
  %s6 = scalar_select 0, %s5, %s3
  loop: start=0, step=1, limit=4
  $region2: #{model_forward.1} parent=0 // loop_pre_header
    _
  $region3: #{model_forward.1} parent=0 // loop_header
    %s8 = sphi 0, %s12
    %p9 = scmp.ge.s32.totalorder %s8, 4
    %s18 = sphi 0, %s20
    %s21 = sphi 0, %s18
    %s22 = sphi 0, %s21
    %s38 = sphi 0, %s22
    %s42 = sphi 0, %s42
    %s44 = sphi 0, %s42
    %s45 = sphi 0, %s44
    %s59 = sphi 0, %s45
    %s65 = sphi 0, %s67
    %s68 = sphi 0, %s65
    %s69 = sphi 0, %s68
    %s85 = sphi 0, %s69
  $region4: #{model_forward.1} parent=0 // loop_header_branch
    %11 = sbr.rel (%p9) target = $region8
  $region5: #{model_forward.1} parent=0 // loop_body
    %s13 = ssub.s32 %s8, 1
    %s14 = ssub.s32 %s8, 2
    %s15 = sadd.s32 %s8, 1
    %s16 = ssub.s32 %s8, %s15
    %p17 = scmp.eq.s32.totalorder %s16, 0
    %s19 = sadd.s32 %s18, 1
    %s20 = scalar_select %p17, %s18, %s19
    %p23 = pneg %p17
    %p24 = scmp.eq.s32.totalorder %s8, 1
    %p25 = por %p23, %p24
    %p26 = scmp.ne.s32.totalorder %s18, %s21
    %p27 = scmp.eq.s32.totalorder %s8, 0
    %p28 = por %p26, %p27
    %p29 = scmp.ne.s32.totalorder %s18, %s21
    %p30 = scmp.eq.s32.totalorder %s13, 1
    %p31 = por %p29, %p30
    %p32 = scmp.ne.s32.totalorder %s21, %s22
    %p33 = scmp.eq.s32.totalorder %s13, 0
    %p34 = por %p32, %p33
    %p35 = scmp.ne.s32.totalorder %s21, %s22
    %p36 = scmp.eq.s32.totalorder %s14, 1
    %p37 = por %p35, %p36
    %p39 = scmp.ne.s32.totalorder %s22, %s38
    %p40 = scmp.eq.s32.totalorder %s14, 0
    %p41 = por %p39, %p40
    %s43 = sadd.s32 %s42, 1
    %p46 = scmp.eq.s32.totalorder %s8, 1
    %p47 = scmp.ne.s32.totalorder %s42, %s44
    %p48 = scmp.eq.s32.totalorder %s8, 0
    %p49 = por %p47, %p48
    %p50 = scmp.ne.s32.totalorder %s42, %s44
    %p51 = scmp.eq.s32.totalorder %s13, 1
    %p52 = por %p50, %p51
    %p53 = scmp.ne.s32.totalorder %s44, %s45
    %p54 = scmp.eq.s32.totalorder %s13, 0
    %p55 = por %p53, %p54
    %p56 = scmp.ne.s32.totalorder %s44, %s45
    %p57 = scmp.eq.s32.totalorder %s14, 1
    %p58 = por %p56, %p57
    %p60 = scmp.ne.s32.totalorder %s45, %s59
    %p61 = scmp.eq.s32.totalorder %s14, 0
    %p62 = por %p60, %p61
    %s63 = ssub.s32 %s8, %s15
    %p64 = scmp.eq.s32.totalorder %s63, 0
    %s66 = sadd.s32 %s65, 1
    %s67 = scalar_select %p64, %s65, %s66
    %p70 = pneg %p64
    %p71 = scmp.eq.s32.totalorder %s8, 1
    %p72 = por %p70, %p71
    %p73 = scmp.ne.s32.totalorder %s65, %s68
    %p74 = scmp.eq.s32.totalorder %s8, 0
    %p75 = por %p73, %p74
    %p76 = scmp.ne.s32.totalorder %s65, %s68
    %p77 = scmp.eq.s32.totalorder %s13, 1
    %p78 = por %p76, %p77
    %p79 = scmp.ne.s32.totalorder %s68, %s69
    %p80 = scmp.eq.s32.totalorder %s13, 0
    %p81 = por %p79, %p80
    %p82 = scmp.ne.s32.totalorder %s68, %s69
    %p83 = scmp.eq.s32.totalorder %s14, 1
    %p84 = por %p82, %p83
    %p86 = scmp.ne.s32.totalorder %s69, %s85
    %p87 = scmp.eq.s32.totalorder %s14, 0
    %p88 = por %p86, %p87
    %p89 = scmp.le.s32.totalorder 1, %s8
    %p90 = scmp.lt.s32.totalorder %s8, 3
    %p91 = pnand %p89, %p90
    %p92 = pneg %p91
    // Predicated region
    $region9: #{model_forward.1} parent=5 // pred_check
      _
    $region10: #{model_forward.1} parent=5 // pred_check_branch
      %94 = sbr.rel (%p91) target = $region12
    $region11: #{model_forward.1} parent=5 // pred_region
      %s95 = ssub.s32 %s8, 1
      // Predicated region
      $region13: #{model_forward.1} parent=11 // pred_check
        %p96 = pneg %p55
      $region14: #{model_forward.1} parent=11 // pred_check_branch
        %98 = sbr.rel (%p96) target = $region16
      $region15: #{model_forward.1} parent=11 // pred_region
        _
      $region16: #{model_forward.1} parent=11 // pred_fallthru
        _
    $region12: #{model_forward.1} parent=5 // pred_fallthru
      _
    %p99 = scmp.lt.s32.totalorder %s8, 2
    // Predicated region
    $region17: #{model_forward.1} parent=5 // pred_check
      %p100 = pneg %p99
    $region18: #{model_forward.1} parent=5 // pred_check_branch
      %102 = sbr.rel (%p100) target = $region20
    $region19: #{model_forward.1} parent=5 // pred_region
      // Predicated region
      $region21: #{model_forward.1} parent=19 // pred_check
        %p103 = pneg %p28
      $region22: #{model_forward.1} parent=19 // pred_check_branch
        %105 = sbr.rel (%p103) target = $region24
      $region23: #{model_forward.1} parent=19 // pred_region
        %p106 = scmp.lt.s32.totalorder %s8, 1
        %s107 = scalar_select %p106, %s8, 1
        %s108 = smul.addr %s107, 2
        %s109 = scalar_lea.vmem %s0, %s108
      $region24: #{model_forward.1} parent=19 // pred_fallthru
        _
    $region20: #{model_forward.1} parent=5 // pred_fallthru
      _
    %p110 = scmp.le.s32.totalorder 1, %s8
    %p111 = scmp.lt.s32.totalorder %s8, 3
    %p112 = pnand %p110, %p111
    %p113 = pneg %p112
    // Predicated region
    $region25: #{model_forward.1} parent=5 // pred_check
      _
    $region26: #{model_forward.1} parent=5 // pred_check_branch
      %115 = sbr.rel (%p112) target = $region28
    $region27: #{model_forward.1} parent=5 // pred_region
      %s116 = ssub.s32 %s8, 1
      %p117 = scmp.lt.s32.totalorder %s13, 1
      %s118 = scalar_select %p117, %s13, 1
      %s119 = smul.addr %s118, 2
      %s120 = scalar_lea.vmem %s0, %s119
      %p121 = pneg %p34
      %p122 = pneg %p31
      %p123 = pneg %p55
      %p124 = pneg %p52
      %p125 = pneg %p81
      %p126 = pneg %p78
      %p127 = scmp.lt.s32.totalorder %s13, 1
      %s128 = scalar_select %p127, %s13, 1
      %s129 = smul.addr %s128, 2
      %s130 = scalar_lea.vmem %s2, %s129
      %p131 = scmp.lt.s32.totalorder %s13, 1
      %s132 = scalar_select %p131, %s13, 1
      %s133 = smul.addr %s132, 2
      %s134 = scalar_lea.vmem %s0, %s133
      %p135 = scmp.lt.s32.totalorder %s13, 1
      %s136 = scalar_select %p135, %s13, 1
      %s137 = smul.addr %s136, 2
      %s138 = scalar_lea.vmem %s2, %s137
      %v139 = vld [vmem:[%s1] sm:$0xff]
      %v140 = vld [vmem:[%s1 + $0x8] sm:$0xff]
      %v141 = vld [vmem:[%s1 + $0x10] sm:$0xff]
      %v142 = vld [vmem:[%s1 + $0x18] sm:$0xff]
      %s143 = scalar_lea.vmem %s1, 32
      %v144 = vld [vmem:[%s143] sm:$0xff]
      %v145 = vld [vmem:[%s143 + $0x8] sm:$0xff]
      %v146 = vld [vmem:[%s143 + $0x10] sm:$0xff]
      %v147 = vld [vmem:[%s143 + $0x18] sm:$0xff]
      %s148 = scalar_lea.vmem %s1, 64
      %v149 = vld [vmem:[%s148] sm:$0xff]
      %v150 = vld [vmem:[%s148 + $0x8] sm:$0xff]
      %v151 = vld [vmem:[%s148 + $0x10] sm:$0xff]
      %v152 = vld [vmem:[%s148 + $0x18] sm:$0xff]
      %s153 = scalar_lea.vmem %s1, 96
      %v154 = vld [vmem:[%s153] sm:$0xff]
      %v155 = vld [vmem:[%s134] sm:$0x3]
      %v157 = vperm.slane %v155, 0
      %v158 = vperm.slane %v155, 1
      %vm161 = vcmask 1040384
      %v162 = vsel %vm161, %v157, 0.0
      %v163 = vsel %vm161, %v158, 0.0
      %v164 = vadd.f32 %v162, %v163
      %165 = vadd.xlane.f32.xlu0 %v164
      %v166 = vpop.xlane.xlu0 %165
      %v167 = vmul.f32 %v155, %v155
      %v169 = vperm.slane %v167, 0
      %v170 = vperm.slane %v167, 1
      %v173 = vsel %vm161, %v169, 0.0
      %v174 = vsel %vm161, %v170, 0.0
      %v175 = vadd.f32 %v173, %v174
      %176 = vadd.xlane.f32.xlu0 %v175
      %v177 = vpop.xlane.xlu0 %176
      %v178 = vperm.slane %v177, 0
      %v179 = vmul.f32 %v178, %v139
      %v180 = vmul.f32 %v178, %v140
      %v181 = vmul.f32 %v178, %v141
      %v182 = vmul.f32 %v178, %v142
      %v183 = vperm.slane %v166, 0
      %v184 = vmul.f32 %v183, %v144
      %v185 = vmul.f32 %v183, %v145
      %v186 = vmul.f32 %v183, %v146
      %v187 = vmul.f32 %v183, %v147
      %v188 = vadd.f32 %v179, %v184
      %v189 = vadd.f32 %v180, %v185
      %v190 = vadd.f32 %v181, %v186
      %v191 = vadd.f32 %v182, %v187
      %v192 = vadd.f32 %v188, %v149
      %v193 = vadd.f32 %v189, %v150
      %v194 = vadd.f32 %v190, %v151
      %v195 = vadd.f32 %v191, %v152
      %vm196 = vcmask 261120
      %v197 = vsel %vm196, %v192, -inf
      %198 = vmax.xlane.f32.xlu0 %v197
      %v199 = vpop.xlane.xlu0 %198
      %v200 = vsel %vm196, %v193, -inf
      %201 = vmax.xlane.f32.xlu0 %v200
      %v202 = vpop.xlane.xlu0 %201
      %v203 = vsel %vm196, %v194, -inf
      %204 = vmax.xlane.f32.xlu0 %v203
      %v205 = vpop.xlane.xlu0 %204
      %v206 = vsel %vm196, %v195, -inf
      %207 = vmax.xlane.f32.xlu0 %v206
      %v208 = vpop.xlane.xlu0 %207
      %v209 = vsub.f32 %v192, %v199
      %v210 = vsub.f32 %v193, %v202
      %v211 = vsub.f32 %v194, %v205
      %v212 = vsub.f32 %v195, %v208
      %v213 = vmul.f32 %v209, 1.442695
      %v214 = vpow.pop %v213
      %v215 = vmul.f32 %v210, 1.442695
      %v216 = vpow.pop %v215
      %v217 = vmul.f32 %v211, 1.442695
      %v218 = vpow.pop %v217
      %v219 = vmul.f32 %v212, 1.442695
      %v220 = vpow.pop %v219
      %v221 = vsel %vm196, %v214, 0.0
      %222 = vadd.xlane.f32.xlu0 %v221
      %v223 = vpop.xlane.xlu0 %222
      %v224 = vsel %vm196, %v216, 0.0
      %225 = vadd.xlane.f32.xlu0 %v224
      %v226 = vpop.xlane.xlu0 %225
      %v227 = vsel %vm196, %v218, 0.0
      %228 = vadd.xlane.f32.xlu0 %v227
      %v229 = vpop.xlane.xlu0 %228
      %v230 = vsel %vm196, %v220, 0.0
      %231 = vadd.xlane.f32.xlu0 %v230
      %v232 = vpop.xlane.xlu0 %231
      %v233 = vrcp.pop %v223
      %v234 = vmul.f32 %v223, %v233
      %v235 = vsub.f32 1.0, %v234
      %v236 = vmul.f32 %v233, %v235
      %v237 = vadd.f32 %v233, %v236
      %vm238 = vweird.f32 %v223
      %vm239 = vweird.f32 %v233
      %vm240 = vmor %vm238, %vm239
      %v241 = vsel %vm240, %v233, %v237
      %v242 = vand.u32 2147483647, %v223
      %vm243 = vcmp.eq.f32.partialorder %v242, 8.507059e+37
      %v244 = vand.u32 %v223, 2147483648
      %v245 = vor.u32 1.1754944e-38, %v244
      %v246 = vsel %vm243, %v245, %v241
      %v247 = vmul.f32 %v214, %v246
      %v248 = vrcp.pop %v226
      %v249 = vmul.f32 %v226, %v248
      %v250 = vsub.f32 1.0, %v249
      %v251 = vmul.f32 %v248, %v250
      %v252 = vadd.f32 %v248, %v251
      %vm253 = vweird.f32 %v226
      %vm254 = vweird.f32 %v248
      %vm255 = vmor %vm253, %vm254
      %v256 = vsel %vm255, %v248, %v252
      %v257 = vand.u32 2147483647, %v226
      %vm258 = vcmp.eq.f32.partialorder %v257, 8.507059e+37
      %v259 = vand.u32 %v226, 2147483648
      %v260 = vor.u32 1.1754944e-38, %v259
      %v261 = vsel %vm258, %v260, %v256
      %v262 = vmul.f32 %v216, %v261
      %v263 = vrcp.pop %v229
      %v264 = vmul.f32 %v229, %v263
      %v265 = vsub.f32 1.0, %v264
      %v266 = vmul.f32 %v263, %v265
      %v267 = vadd.f32 %v263, %v266
      %vm268 = vweird.f32 %v229
      %vm269 = vweird.f32 %v263
      %vm270 = vmor %vm268, %vm269
      %v271 = vsel %vm270, %v263, %v267
      %v272 = vand.u32 2147483647, %v229
      %vm273 = vcmp.eq.f32.partialorder %v272, 8.507059e+37
      %v274 = vand.u32 %v229, 2147483648
      %v275 = vor.u32 1.1754944e-38, %v274
      %v276 = vsel %vm273, %v275, %v271
      %v277 = vmul.f32 %v218, %v276
      %v278 = vrcp.pop %v232
      %v279 = vmul.f32 %v232, %v278
      %v280 = vsub.f32 1.0, %v279
      %v281 = vmul.f32 %v278, %v280
      %v282 = vadd.f32 %v278, %v281
      %vm283 = vweird.f32 %v232
      %vm284 = vweird.f32 %v278
      %vm285 = vmor %vm283, %vm284
      %v286 = vsel %vm285, %v278, %v282
      %v287 = vand.u32 2147483647, %v232
      %vm288 = vcmp.eq.f32.partialorder %v287, 8.507059e+37
      %v289 = vand.u32 %v232, 2147483648
      %v290 = vor.u32 1.1754944e-38, %v289
      %v291 = vsel %vm288, %v290, %v286
      %v292 = vmul.f32 %v220, %v291
      %v294 = vrot.slane %v154, 2
      %v295 = vsel %vm196, %v294, 0
      %297 = vmatpush.msra.mxu0 0.0
      %298 = vmatpush.msra.mxu0 0.0
      %299 = vmatpush.msra.mxu0 0.0
      %300 = vmatpush.msra.mxu0 0.0
      %301 = vmatpush.msra.mxu0 0.0
      %302 = vmatpush.msra.mxu0 0.0
      %303 = vmatpush.msra.mxu0 0.0
      %304 = vmatpush.msra.mxu0 0.0
      %305 = vmatpush.msra.mxu0 0.0
      %306 = vmatpush.msra.mxu0 0.0
      %307 = vmatpush.msra.mxu0 0.0
      %308 = vmatpush.msra.mxu0 0.0
      %309 = vmatpush.msra.mxu0 %v292
      %310 = vmatpush.msra.mxu0 %v277
      %311 = vmatpush.msra.mxu0 %v262
      %312 = vmatpush.msra.mxu0 %v247
      %313 = vmatmul.f32.gmra.mxu0 %v295
      %v314 = vpop.f32.mrf.mxu0
      %v315 = vadd.f32 0.0, %v314
      %316 = vdwg.mxu0
      %v317 = vmul.f32 %v315, %v154
      %vm318 = vcmask 253952
      %v319 = vsel %vm318, %v317, 0.0
      %320 = vadd.xlane.f32.xlu0 %v319
      %v321 = vpop.xlane.xlu0 %320
      %v322 = vrot.slane %v154, 1
      %v324 = vmul.f32 %v315, %v322
      %v325 = vsel %vm318, %v324, 0.0
      %326 = vadd.xlane.f32.xlu0 %v325
      %v327 = vpop.xlane.xlu0 %326
      %v328 = vrot.slane %v154, 3
      %v330 = vadd.f32 %v327, %v328
      %v331 = vmul.f32 %v321, %v157
      %v332 = vmul.f32 %v321, %v158
      %334 = vset.pattern.permute.xlu0 0
      %335 = vperm.xlu0 %334, %v330
      %v336 = vpop.permute.xlu0 %335
      %v338 = vadd.f32 %v331, %v336
      %v339 = vadd.f32 %v332, %v336
      %v342 = vrot.slane %v339, 7
      %v343 = vsel %vm161, %v338, %v342
      %v345 = vlaneseq
      %vm346 = vcmp.ge.s32.totalorder %v345, 0
      %vm347 = vcmp.lt.s32.totalorder %v345, 256
      %vm348 = vmand %vm346, %vm347
      %349 = vst.msk [vmem:[%s138] sm:$0x3] %vm348, %v343
      %p350 = scmp.lt.s32.totalorder %s13, 1
      %s351 = scalar_select %p350, %s13, 1
      %s352 = smul.addr %s351, 2
      %s353 = scalar_lea.vmem %s2, %s352
      // Predicated region
      $region29: #{model_forward.1} parent=27 // pred_check
        %p354 = pneg %p78
      $region30: #{model_forward.1} parent=27 // pred_check_branch
        %356 = sbr.rel (%p354) target = $region32
      $region31: #{model_forward.1} parent=27 // pred_region
        _
      $region32: #{model_forward.1} parent=27 // pred_fallthru
        _
    $region28: #{model_forward.1} parent=5 // pred_fallthru
      _
    %p357 = scmp.le.s32.totalorder 2, %s8
    // Predicated region
    $region33: #{model_forward.1} parent=5 // pred_check
      %p358 = pneg %p357
    $region34: #{model_forward.1} parent=5 // pred_check_branch
      %360 = sbr.rel (%p358) target = $region36
    $region35: #{model_forward.1} parent=5 // pred_region
      %s361 = ssub.s32 %s8, 2
      // Predicated region
      $region37: #{model_forward.1} parent=35 // pred_check
        %p362 = pneg %p84
      $region38: #{model_forward.1} parent=35 // pred_check_branch
        %364 = sbr.rel (%p362) target = $region40
      $region39: #{model_forward.1} parent=35 // pred_region
        %p365 = scmp.lt.s32.totalorder %s14, 1
        %s366 = scalar_select %p365, %s14, 1
        %s367 = smul.addr %s366, 2
        %s368 = scalar_lea.vmem %s2, %s367
      $region40: #{model_forward.1} parent=35 // pred_fallthru
        _
    $region36: #{model_forward.1} parent=5 // pred_fallthru
      _
  $region6: #{model_forward.1} parent=0 // loop_footer
    %s12 = sadd.s32 1, %s8
  $region7: #{model_forward.1} parent=0 // loop_footer_branch
    %7 = sbr.rel target = $region3
  $region8: #{model_forward.1} parent=0 // loop_exit
    _

</llo_original>
